<compile_context>
chip_gen: v7x
topology: tpu7x:2x2x1
jax: 0.10.0
libtpu: 0.0.40
codegen_flags: <defaults>
</compile_context>

<pallas_src>
import jax
import jax.numpy as jnp
from jax.experimental import pallas as pl
from jax.experimental.pallas import tpu as pltpu

_LANE = 128
_SUBLANE = 8
_TARGET_BLOCK_BYTES = 512 * 1024      # ~512 KiB f32 data block (~85% of HBM roofline)
_MAX_ROW_BLOCK = 1024


def _round_up(x, m):
    return (x + m - 1) // m * m


def _choose_block_shape(N, L):
    """Pick (n_blk, l_blk) for the (N, L) interleaved view.

    n_blk is a multiple of 8 (or == N), l_blk a multiple of 128, sized so the
    data block is ~_TARGET_BLOCK_BYTES (amortizes the ~0.35 us per-step pipeline
    overhead).  For 16 <= N <= 1024 we keep >= 2 row blocks so the "parallel"
    row axis can feed both TensorCores on v7x.
    """
    if N > _MAX_ROW_BLOCK:
        n_blk = _MAX_ROW_BLOCK                       # multiple of 8, last block clipped
    elif N >= 2 * _SUBLANE:
        n_blk = _round_up((N + 1) // 2, _SUBLANE)    # >= 2 row blocks
    else:
        n_blk = N                                    # == full dim -> always legal
    l_cap = _round_up(L, _LANE)
    l_blk = _round_up(max(_TARGET_BLOCK_BYTES // (4 * n_blk), _LANE), _LANE)
    l_blk = min(l_blk, l_cap)
    return n_blk, l_blk


def _homog_kernel(coef_ref, xy_ref, o_ref, cs_tab, cp_tab, tr_tab):
    """One (n_blk, l_blk) tile of the homogeneous transform.

    coef_ref : (n_blk, 4)      per-row [s*cos r, s*sin r, tx, ty]
    xy_ref   : (n_blk, l_blk)  interleaved coords [x0, y0, x1, y1, ...]
    o_ref    : (n_blk, l_blk)  transformed coords, same interleaving
    *_tab    : (n_blk, l_blk)  VMEM lane tables, rebuilt once per row block
    """
    n_blk, l_blk = o_ref.shape

    # Expand per-row scalars into lane tables once per row block.  Grid axis 1
    # is the inner ("arbitrary") axis, so k == 0 marks a new row block and the
    # tables remain valid for every k of that row block.
    @pl.when(pl.program_id(1) == 0)
    def _build_tables():
        lane = jax.lax.broadcasted_iota(jnp.int32, (n_blk, l_blk), 1)
        is_x = (lane & 1) == 0                       # even lanes hold x, odd hold y
        sc = coef_ref[:, 0:1]                        # s*cos(r)
        ss = coef_ref[:, 1:2]                        # s*sin(r)
        tx = coef_ref[:, 2:3]
        ty = coef_ref[:, 3:4]
        cs_tab[...] = jnp.broadcast_to(sc, (n_blk, l_blk))
        cp_tab[...] = jnp.where(is_x, ss, -ss)       # coefficient of the partner coord
        tr_tab[...] = jnp.where(is_x, tx, ty)        # translation

    xy = xy_ref[...]
    # Partner coordinate of every lane (y for x-lanes, x for y-lanes).
    # pltpu.roll requires non-negative shifts: shift = l_blk-1 == roll by -1.
    # Wrap-around only affects lane 0 (for prv) and lane l_blk-1 (for nxt),
    # neither of which is ever selected by its parity.
    nxt = pltpu.roll(xy, shift=l_blk - 1, axis=1)    # nxt[i] = xy[i + 1]
    prv = pltpu.roll(xy, shift=1, axis=1)            # prv[i] = xy[i - 1]
    lane = jax.lax.broadcasted_iota(jnp.int32, (n_blk, l_blk), 1)
    is_x = (lane & 1) == 0
    partner = jnp.where(is_x, nxt, prv)
    # x-lane: sc*x + ss*y + tx ; y-lane: sc*y - ss*x + ty
    o_ref[...] = cs_tab[...] * xy + cp_tab[...] * partner + tr_tab[...]


def homogeneous_transformation_layer(shapes, params, block_shape=None):
    """shapes: (N, P, 2); params: (N, >=4[, 1]) -> (N, P, 2) float32."""
    shapes = jnp.asarray(shapes, jnp.float32)
    N, P, n_dims = shapes.shape
    assert n_dims == 2, "Layer for other dimensionality specified"
    params = jnp.asarray(params, jnp.float32).reshape(N, -1)[:, :4]

    # Tiny per-row coefficient precompute (keeps sin/cos out of the kernel).
    s, r = params[:, 0], params[:, 1]
    coef = jnp.stack(
        [s * jnp.cos(r), s * jnp.sin(r), params[:, 2], params[:, 3]], axis=-1)

    L = 2 * P
    xy = shapes.reshape(N, L)                        # free view of row-major (N, P, 2)

    if block_shape is None:
        n_blk, l_blk = _choose_block_shape(N, L)
    else:
        n_blk, l_blk = block_shape
    grid = (pl.cdiv(N, n_blk), pl.cdiv(L, l_blk))

    out = pl.pallas_call(
        _homog_kernel,
        out_shape=jax.ShapeDtypeStruct((N, L), jnp.float32),
        grid=grid,
        in_specs=[
            pl.BlockSpec((n_blk, 4), lambda i, k: (i, 0)),       # per-row coefficients
            pl.BlockSpec((n_blk, l_blk), lambda i, k: (i, k)),   # interleaved coords
        ],
        out_specs=pl.BlockSpec((n_blk, l_blk), lambda i, k: (i, k)),
        scratch_shapes=[
            pltpu.VMEM((n_blk, l_blk), jnp.float32),   # cs_tab: s*cos(r)
            pltpu.VMEM((n_blk, l_blk), jnp.float32),   # cp_tab: +/- s*sin(r)
            pltpu.VMEM((n_blk, l_blk), jnp.float32),   # tr_tab: tx / ty
        ],
        compiler_params=pltpu.CompilerParams(
            dimension_semantics=("parallel", "arbitrary"),
            vmem_limit_bytes=32 * 1024 * 1024,
        ),
        cost_estimate=pl.CostEstimate(
            flops=4 * N * L,
            transcendentals=0,
            bytes_accessed=2 * N * L * 4 + N * 16,
        ),
    )(coef, xy)

    return out.reshape(N, P, 2)                      # free view


def _reference(shapes, params):
    """Pure-JAX reference mirroring the PyTorch module exactly."""
    shapes = jnp.asarray(shapes, jnp.float32)
    N = shapes.shape[0]
    params = jnp.asarray(params, jnp.float32).reshape(N, -1)[:, :4]
    s, r, t = params[:, 0], params[:, 1], params[:, 2:4]
    c, sn = jnp.cos(r), jnp.sin(r)
    T = jnp.zeros((N, 3, 3), jnp.float32)
    T = T.at[:, 0, 0].set(s * c).at[:, 0, 1].set(s * sn)
    T = T.at[:, 1, 0].set(-s * sn).at[:, 1, 1].set(s * c)
    T = T.at[:, 0, 2].set(t[:, 0]).at[:, 1, 2].set(t[:, 1])
    T = T.at[:, 2, 2].set(1.0)
    ones = jnp.ones(shapes.shape[:-1] + (1,), shapes.dtype)
    h = jnp.concatenate([shapes, ones], axis=-1)     # (N, P, 3)
    out = jnp.einsum("npk,njk->npj", h, T)           # bmm(h, T^T)
    return out[..., :2]


def _check(shapes, params, block_shape=None, tag=""):
    out = jax.block_until_ready(
        homogeneous_transformation_layer(shapes, params, block_shape=block_shape))
    ref = _reference(shapes, params)
    assert out.shape == ref.shape, f"shape mismatch {tag}"
    assert jnp.allclose(out, ref, atol=1e-5, rtol=1e-5), f"mismatch vs reference {tag}"


if __name__ == "__main__":
    key = jax.random.PRNGKey(0)
    k1, k2, k3, k4, k5, k6, k7, k8 = jax.random.split(key, 8)

    # Case 1: lane-aligned point count, single block.
    _check(jax.random.normal(k1, (2, 512, 2), dtype=jnp.float32),
           jax.random.normal(k2, (2, 4), dtype=jnp.float32), tag="(aligned)")

    # Case 2: unaligned point count -> boundary lane clipping (no wrapper pad).
    _check(jax.random.normal(k3, (3, 100, 2), dtype=jnp.float32),
           jax.random.normal(k4, (3, 4), dtype=jnp.float32), tag="(unaligned P)")

    # Case 3: multiple row blocks with row + lane clipping.
    _check(jax.random.normal(k5, (20, 70, 2), dtype=jnp.float32),
           jax.random.normal(k6, (20, 4), dtype=jnp.float32), tag="(row blocks)")

    # Case 4: forced small blocks -> multi-step inner axis, exercises the
    # once-per-row-block lane-table build + reuse path.
    _check(jax.random.normal(k7, (16, 256, 2), dtype=jnp.float32),
           jax.random.normal(k8, (16, 4), dtype=jnp.float32),
           block_shape=(8, 128), tag="(multi-k reuse)")

    print("KERNEL_OK")
</pallas_src>

<mosaic_0001>
module attributes {stable_mosaic.version = 11 : i64} {
  func.func @_homog_kernel(%arg0: i32, %arg1: i32, %arg2: memref<2x4xf32, #tpu.memory_space<vmem>>, %arg3: memref<2x1024xf32, #tpu.memory_space<vmem>>, %arg4: memref<2x1024xf32, #tpu.memory_space<vmem>>, %arg5: memref<2x1024xf32, #tpu.memory_space<vmem>>, %arg6: memref<2x1024xf32, #tpu.memory_space<vmem>>, %arg7: memref<2x1024xf32, #tpu.memory_space<vmem>>) attributes {dimension_semantics = [#tpu.dimension_semantics<parallel>, #tpu.dimension_semantics<arbitrary>], iteration_bounds = array<i64: 1, 1>, scalar_prefetch = 0 : i64, scratch_operands = 3 : i64, tpu.core_type = #tpu.core_type<tc>, window_params = [{transform_indices = @transform_0, window_bounds = array<i64: 2, 4>}, {transform_indices = @transform_1, window_bounds = array<i64: 2, 1024>}, {transform_indices = @transform_2, window_bounds = array<i64: 2, 1024>}]} {
    %c0_i32 = arith.constant 0 : i32
    %0 = arith.cmpi eq, %arg1, %c0_i32 : i32
    %1 = arith.extui %0 : i1 to i32
    %c0_i32_0 = arith.constant 0 : i32
    %2 = arith.cmpi ne, %1, %c0_i32_0 : i32
    scf.if %2 {
      %20 = tpu.iota {dimensions = array<i32: 1>} : vector<2x1024xi32>
      %c1_i32_12 = arith.constant 1 : i32
      %21 = vector.broadcast %c1_i32_12 : i32 to vector<2x1024xi32>
      %22 = arith.andi %20, %21 : vector<2x1024xi32>
      %c0_i32_13 = arith.constant 0 : i32
      %23 = vector.broadcast %c0_i32_13 : i32 to vector<2x1024xi32>
      %24 = arith.cmpi eq, %22, %23 : vector<2x1024xi32>
      %c0_14 = arith.constant 0 : index
      %c0_15 = arith.constant 0 : index
      %25 = vector.load %arg2[%c0_14, %c0_15] : memref<2x4xf32, #tpu.memory_space<vmem>>, vector<2x1xf32>
      %c0_16 = arith.constant 0 : index
      %c1 = arith.constant 1 : index
      %26 = vector.load %arg2[%c0_16, %c1] : memref<2x4xf32, #tpu.memory_space<vmem>>, vector<2x1xf32>
      %c0_17 = arith.constant 0 : index
      %c2 = arith.constant 2 : index
      %27 = vector.load %arg2[%c0_17, %c2] : memref<2x4xf32, #tpu.memory_space<vmem>>, vector<2x1xf32>
      %c0_18 = arith.constant 0 : index
      %c3 = arith.constant 3 : index
      %28 = vector.load %arg2[%c0_18, %c3] : memref<2x4xf32, #tpu.memory_space<vmem>>, vector<2x1xf32>
      %29 = vector.shape_cast %25 : vector<2x1xf32> to vector<2x1xf32>
      %30 = vector.broadcast %29 : vector<2x1xf32> to vector<2x1024xf32>
      %c0_19 = arith.constant 0 : index
      %c0_20 = arith.constant 0 : index
      %31 = vector.load %arg5[%c0_19, %c0_20] : memref<2x1024xf32, #tpu.memory_space<vmem>>, vector<2x1024xf32>
      tpu.vector_store %arg5[%c0_19, %c0_20], %30 {strides = array<i32>} : memref<2x1024xf32, #tpu.memory_space<vmem>>, vector<2x1024xf32>,
      %cst = arith.constant 0.000000e+00 : f32
      %32 = vector.broadcast %cst : f32 to vector<2x1xf32>
      %33 = arith.subf %32, %26 : vector<2x1xf32>
      %34 = vector.shape_cast %26 : vector<2x1xf32> to vector<2x1xf32>
      %35 = vector.broadcast %34 : vector<2x1xf32> to vector<2x1024xf32>
      %36 = vector.shape_cast %33 : vector<2x1xf32> to vector<2x1xf32>
      %37 = vector.broadcast %36 : vector<2x1xf32> to vector<2x1024xf32>
      %38 = arith.select %24, %35, %37 : vector<2x1024xi1>, vector<2x1024xf32>
      %c0_21 = arith.constant 0 : index
      %c0_22 = arith.constant 0 : index
      %39 = vector.load %arg6[%c0_21, %c0_22] : memref<2x1024xf32, #tpu.memory_space<vmem>>, vector<2x1024xf32>
      tpu.vector_store %arg6[%c0_21, %c0_22], %38 {strides = array<i32>} : memref<2x1024xf32, #tpu.memory_space<vmem>>, vector<2x1024xf32>,
      %40 = vector.shape_cast %27 : vector<2x1xf32> to vector<2x1xf32>
      %41 = vector.broadcast %40 : vector<2x1xf32> to vector<2x1024xf32>
      %42 = vector.shape_cast %28 : vector<2x1xf32> to vector<2x1xf32>
      %43 = vector.broadcast %42 : vector<2x1xf32> to vector<2x1024xf32>
      %44 = arith.select %24, %41, %43 : vector<2x1024xi1>, vector<2x1024xf32>
      %c0_23 = arith.constant 0 : index
      %c0_24 = arith.constant 0 : index
      %45 = vector.load %arg7[%c0_23, %c0_24] : memref<2x1024xf32, #tpu.memory_space<vmem>>, vector<2x1024xf32>
      tpu.vector_store %arg7[%c0_23, %c0_24], %44 {strides = array<i32>} : memref<2x1024xf32, #tpu.memory_space<vmem>>, vector<2x1024xf32>,
    } else {
    }
    %c0 = arith.constant 0 : index
    %c0_1 = arith.constant 0 : index
    %3 = vector.load %arg3[%c0, %c0_1] : memref<2x1024xf32, #tpu.memory_space<vmem>>, vector<2x1024xf32>
    %c1023_i32 = arith.constant 1023 : i32
    %4 = tpu.dynamic_rotate %3 by %c1023_i32 dim 1 : vector<2x1024xf32>, i32 -> vector<2x1024xf32>
    %c1_i32 = arith.constant 1 : i32
    %5 = tpu.dynamic_rotate %3 by %c1_i32 dim 1 : vector<2x1024xf32>, i32 -> vector<2x1024xf32>
    %6 = tpu.iota {dimensions = array<i32: 1>} : vector<2x1024xi32>
    %c1_i32_2 = arith.constant 1 : i32
    %7 = vector.broadcast %c1_i32_2 : i32 to vector<2x1024xi32>
    %8 = arith.andi %6, %7 : vector<2x1024xi32>
    %c0_i32_3 = arith.constant 0 : i32
    %9 = vector.broadcast %c0_i32_3 : i32 to vector<2x1024xi32>
    %10 = arith.cmpi eq, %8, %9 : vector<2x1024xi32>
    %11 = arith.select %10, %4, %5 : vector<2x1024xi1>, vector<2x1024xf32>
    %c0_4 = arith.constant 0 : index
    %c0_5 = arith.constant 0 : index
    %12 = vector.load %arg5[%c0_4, %c0_5] : memref<2x1024xf32, #tpu.memory_space<vmem>>, vector<2x1024xf32>
    %13 = arith.mulf %12, %3 : vector<2x1024xf32>
    %c0_6 = arith.constant 0 : index
    %c0_7 = arith.constant 0 : index
    %14 = vector.load %arg6[%c0_6, %c0_7] : memref<2x1024xf32, #tpu.memory_space<vmem>>, vector<2x1024xf32>
    %15 = arith.mulf %14, %11 : vector<2x1024xf32>
    %16 = arith.addf %13, %15 : vector<2x1024xf32>
    %c0_8 = arith.constant 0 : index
    %c0_9 = arith.constant 0 : index
    %17 = vector.load %arg7[%c0_8, %c0_9] : memref<2x1024xf32, #tpu.memory_space<vmem>>, vector<2x1024xf32>
    %18 = arith.addf %16, %17 : vector<2x1024xf32>
    %c0_10 = arith.constant 0 : index
    %c0_11 = arith.constant 0 : index
    %19 = vector.load %arg4[%c0_10, %c0_11] : memref<2x1024xf32, #tpu.memory_space<vmem>>, vector<2x1024xf32>
    tpu.vector_store %arg4[%c0_10, %c0_11], %18 {strides = array<i32>} : memref<2x1024xf32, #tpu.memory_space<vmem>>, vector<2x1024xf32>,
    return
  }
  func.func @transform_0(%arg0: i32, %arg1: i32) -> (i32, i32) {
    %c0_i32 = arith.constant 0 : i32
    %c0_i32_0 = arith.constant 0 : i32
    return %arg0, %c0_i32 : i32, i32
  }
  func.func @transform_1(%arg0: i32, %arg1: i32) -> (i32, i32) {
    %c0_i32 = arith.constant 0 : i32
    return %arg0, %arg1 : i32, i32
  }
  func.func @transform_2(%arg0: i32, %arg1: i32) -> (i32, i32) {
    %c0_i32 = arith.constant 0 : i32
    return %arg0, %arg1 : i32, i32
  }
}

</mosaic_0001>

<llo_original>
// kernel: tpu_custom_call.1
$region0: #{tpu_custom_call.1}
  #allocation0 [shape = 'u32[]', space=smem, size = 0x4, offset = 0x4, fixed_abs, tag = 'smem constant byte address 0x4 - core index']
  #allocation1 [shape = 'u32[144,128]{1,0:T(1,128)}', space=vmem, size = 0x12000, scoped, tag = 'internal scratch']
  #allocation2 [shape = 'f32[2,1024]{1,0:T(2,128)}', space=vmem, size = 0x2000, scoped, tag = 'scratch operand']
  #allocation3 [shape = 'f32[2,1024]{1,0:T(2,128)}', space=vmem, size = 0x2000, scoped, tag = 'scratch operand']
  #allocation4 [shape = 'f32[2,1024]{1,0:T(2,128)}', space=vmem, size = 0x2000, scoped, tag = 'scratch operand']
  %s0 = inlined_call_operand.hbm [shape: f32[2,4], index: 0, kind: input, shape index: {}]
  %s1 = inlined_call_operand.hbm [shape: f32[2,1024], index: 1, kind: input, shape index: {}]
  %s2 = inlined_call_operand.hbm [shape: f32[2,1024], index: 2, kind: output, shape index: {}]
  %s3 = sld [smem:[#allocation0]]
  $region30: #{tpu_custom_call.1} parent=0
    _
  %s5 = ssub.s32 1, %s3
  %s6 = scalar_select 0, %s5, %s3
  $region1: #{tpu_custom_call.1} parent=0
    #allocation5 [shape = 'u8[1024]{0}', space=vmem, size = 0x400, scoped, tag = 'input window, operand 0, single buffered']
    #allocation6 [shape = 's32[1]{0}', space=sflag, size = 0x4, scoped, tag = 'scoped memory for tpu_custom_call.1']
    #allocation7 [shape = 's32[1]{0}', space=sflag, size = 0x4, scoped, tag = 'scoped memory for tpu_custom_call.1']
    #allocation8 [shape = 'u8[8192]{0}', space=vmem, size = 0x2000, scoped, tag = 'input window, operand 1, single buffered']
    #allocation9 [shape = 's32[1]{0}', space=sflag, size = 0x4, scoped, tag = 'scoped memory for tpu_custom_call.1']
    #allocation10 [shape = 'u8[8192]{0}', space=vmem, size = 0x2000, scoped, tag = 'output window, operand 0, single buffered']
    %7 = vsyncpa [#allocation6], 0
    %8 = vsyncpa [#allocation9], 0
    %9 = vsyncpa [#allocation7], 0
    // Predicated region
    $region2: #{tpu_custom_call.1} parent=1 // pred_check
      _
    $region3: #{tpu_custom_call.1} parent=1 // pred_check_branch
      %11 = sbr.rel (0) target = $region5
    $region4: #{tpu_custom_call.1} parent=1 // pred_region
      %s13 = ssub.s32 32, 32
      %14 = vsyncadd [#allocation6], %s13
      %s16 = sshll.u32 [#allocation5], 4
      %s17 = int_to_ptr.vmem [resolvable:$true] %s16
      %19 = dma.hbm_to_vmem [thread:$0]  %s0, 32, %s17, [#allocation6]
    $region5: #{tpu_custom_call.1} parent=1 // pred_fallthru
      _
    // Predicated region
    $region6: #{tpu_custom_call.1} parent=1 // pred_check
      _
    $region7: #{tpu_custom_call.1} parent=1 // pred_check_branch
      %21 = sbr.rel (0) target = $region9
    $region8: #{tpu_custom_call.1} parent=1 // pred_region
      %s23 = ssub.s32 256, 256
      %24 = vsyncadd [#allocation9], %s23
      %s26 = sshll.u32 [#allocation8], 4
      %s27 = int_to_ptr.vmem [resolvable:$true] %s26
      %29 = dma.hbm_to_vmem [thread:$0]  %s1, 256, %s27, [#allocation9]
    $region9: #{tpu_custom_call.1} parent=1 // pred_fallthru
      _
    // Predicated region
    $region10: #{tpu_custom_call.1} parent=1 // pred_check
      _
    $region11: #{tpu_custom_call.1} parent=1 // pred_check_branch
      %31 = sbr.rel (0) target = $region13
    $region12: #{tpu_custom_call.1} parent=1 // pred_region
      %32 = dma.done [#allocation6], 32
    $region13: #{tpu_custom_call.1} parent=1 // pred_fallthru
      _
    // Predicated region
    $region14: #{tpu_custom_call.1} parent=1 // pred_check
      _
    $region15: #{tpu_custom_call.1} parent=1 // pred_check_branch
      %34 = sbr.rel (0) target = $region17
    $region16: #{tpu_custom_call.1} parent=1 // pred_region
      %35 = dma.done [#allocation9], 256
    $region17: #{tpu_custom_call.1} parent=1 // pred_fallthru
      _
    %p36 = scmp.eq.s32.totalorder 0, 0
    // Predicated region
    $region18: #{tpu_custom_call.1} parent=1 // pred_check
      %p37 = pneg %p36
    $region19: #{tpu_custom_call.1} parent=1 // pred_check_branch
      %39 = sbr.rel (%p37) target = $region21
    $region20: #{tpu_custom_call.1} parent=1 // pred_region
      %v40 = vlaneseq
      %v41 = vand.u32 %v40, 127
      %v42 = vadd.s32 %v41, 128
      %v43 = vadd.s32 %v41, 256
      %v44 = vadd.s32 %v41, 384
      %v45 = vadd.s32 %v41, 512
      %v46 = vadd.s32 %v41, 640
      %v47 = vadd.s32 %v41, 768
      %v48 = vadd.s32 %v41, 896
      %v49 = vand.u32 %v41, 1
      %v50 = vand.u32 %v42, 1
      %v51 = vand.u32 %v43, 1
      %v52 = vand.u32 %v44, 1
      %v53 = vand.u32 %v45, 1
      %v54 = vand.u32 %v46, 1
      %v55 = vand.u32 %v47, 1
      %v56 = vand.u32 %v48, 1
      %vm57 = vcmp.eq.s32.totalorder %v49, 0
      %vm58 = vcmp.eq.s32.totalorder %v50, 0
      %vm59 = vcmp.eq.s32.totalorder %v51, 0
      %vm60 = vcmp.eq.s32.totalorder %v52, 0
      %vm61 = vcmp.eq.s32.totalorder %v53, 0
      %vm62 = vcmp.eq.s32.totalorder %v54, 0
      %vm63 = vcmp.eq.s32.totalorder %v55, 0
      %vm64 = vcmp.eq.s32.totalorder %v56, 0
      %v65 = vld [vmem:[#allocation5] sm:$0x3]
      %67 = vset.pattern.permute.xlu0 0
      %68 = vperm.xlu0 %67, %v65
      %v69 = vpop.permute.xlu0 %68
      %v71 = vunpack.c.l.s4 269488144
      %v72 = vunpack.c.0.s8 %v71
      %v73 = vlaneseq
      %v74 = vshrl.u32 %v73, 7
      %v75 = vsub.s32 %v72, %v74
      %v76 = vrot.slane %v69, %v75
      %78 = vst [vmem:[#allocation2] sm:$0xff] %v76
      %79 = vst [vmem:[#allocation2 + $0x8] sm:$0xff] %v76
      %v80 = vsub.f32 0.0, %v65
      %81 = vset.pattern.permute.xlu0 1
      %82 = vperm.xlu0 %81, %v65
      %v83 = vpop.permute.xlu0 %82
      %86 = vset.pattern.permute.xlu0 1
      %87 = vperm.xlu0 %86, %v80
      %v88 = vpop.permute.xlu0 %87
      %v90 = vsel %vm57, %v83, %v88
      %v91 = vsel %vm58, %v83, %v88
      %v92 = vsel %vm59, %v83, %v88
      %v93 = vsel %vm60, %v83, %v88
      %v94 = vsel %vm61, %v83, %v88
      %v95 = vsel %vm62, %v83, %v88
      %v96 = vsel %vm63, %v83, %v88
      %v97 = vsel %vm64, %v83, %v88
      %v106 = vcombine.low %v90, %v91
      %v107 = vcombine.low %v92, %v93
      %v109 = vunpack.c.l.s4 1983009808
      %v110 = vunpack.c.0.s8 %v109
      %v111 = vlaneseq
      %v112 = vshrl.u32 %v111, 7
      %v113 = vsub.s32 %v110, %v112
      %v114 = vrot.slane %v106, %v113
      %v116 = vunpack.c.l.s4 1983009808
      %v117 = vunpack.c.0.s8 %v116
      %v118 = vlaneseq
      %v119 = vshrl.u32 %v118, 7
      %v120 = vsub.s32 %v117, %v119
      %v121 = vrot.slane %v107, %v120
      %v122 = vcombine.low %v114, %v121
      %v123 = vcombine.low %v94, %v95
      %v124 = vcombine.low %v96, %v97
      %v126 = vunpack.c.l.s4 1983009808
      %v127 = vunpack.c.0.s8 %v126
      %v128 = vlaneseq
      %v129 = vshrl.u32 %v128, 7
      %v130 = vsub.s32 %v127, %v129
      %v131 = vrot.slane %v123, %v130
      %v133 = vunpack.c.l.s4 1983009808
      %v134 = vunpack.c.0.s8 %v133
      %v135 = vlaneseq
      %v136 = vshrl.u32 %v135, 7
      %v137 = vsub.s32 %v134, %v136
      %v138 = vrot.slane %v124, %v137
      %v139 = vcombine.low %v131, %v138
      %142 = vst [vmem:[#allocation3] sm:$0xff] %v122
      %143 = vst [vmem:[#allocation3 + $0x8] sm:$0xff] %v139
      %144 = vset.pattern.permute.xlu0 2
      %145 = vperm.xlu0 %144, %v65
      %v146 = vpop.permute.xlu0 %145
      %148 = vset.pattern.permute.xlu0 3
      %149 = vperm.xlu0 %148, %v65
      %v150 = vpop.permute.xlu0 %149
      %v152 = vsel %vm57, %v146, %v150
      %v153 = vsel %vm58, %v146, %v150
      %v154 = vsel %vm59, %v146, %v150
      %v155 = vsel %vm60, %v146, %v150
      %v156 = vsel %vm61, %v146, %v150
      %v157 = vsel %vm62, %v146, %v150
      %v158 = vsel %vm63, %v146, %v150
      %v159 = vsel %vm64, %v146, %v150
      %v168 = vcombine.low %v152, %v153
      %v169 = vcombine.low %v154, %v155
      %v171 = vunpack.c.l.s4 1983009808
      %v172 = vunpack.c.0.s8 %v171
      %v173 = vlaneseq
      %v174 = vshrl.u32 %v173, 7
      %v175 = vsub.s32 %v172, %v174
      %v176 = vrot.slane %v168, %v175
      %v178 = vunpack.c.l.s4 1983009808
      %v179 = vunpack.c.0.s8 %v178
      %v180 = vlaneseq
      %v181 = vshrl.u32 %v180, 7
      %v182 = vsub.s32 %v179, %v181
      %v183 = vrot.slane %v169, %v182
      %v184 = vcombine.low %v176, %v183
      %v185 = vcombine.low %v156, %v157
      %v186 = vcombine.low %v158, %v159
      %v188 = vunpack.c.l.s4 1983009808
      %v189 = vunpack.c.0.s8 %v188
      %v190 = vlaneseq
      %v191 = vshrl.u32 %v190, 7
      %v192 = vsub.s32 %v189, %v191
      %v193 = vrot.slane %v185, %v192
      %v195 = vunpack.c.l.s4 1983009808
      %v196 = vunpack.c.0.s8 %v195
      %v197 = vlaneseq
      %v198 = vshrl.u32 %v197, 7
      %v199 = vsub.s32 %v196, %v198
      %v200 = vrot.slane %v186, %v199
      %v201 = vcombine.low %v193, %v200
      %204 = vst [vmem:[#allocation4] sm:$0xff] %v184
      %205 = vst [vmem:[#allocation4 + $0x8] sm:$0xff] %v201
    $region21: #{tpu_custom_call.1} parent=1 // pred_fallthru
      _
    %v206 = vld [vmem:[#allocation8] sm:$0xff]
    %v207 = vld [vmem:[#allocation8 + $0x8] sm:$0xff]
    %v210 = vcombine.high %v206, %v206
    %v212 = vunpack.c.l.s4 1983009808
    %v213 = vunpack.c.0.s8 %v212
    %v214 = vlaneseq
    %v215 = vshrl.u32 %v214, 7
    %v216 = vsub.s32 %v213, %v215
    %v217 = vrot.slane %v206, %v216
    %v219 = vunpack.c.l.s4 1983009808
    %v220 = vunpack.c.0.s8 %v219
    %v221 = vlaneseq
    %v222 = vshrl.u32 %v221, 7
    %v223 = vsub.s32 %v220, %v222
    %v224 = vrot.slane %v210, %v223
    %v225 = vcombine.high %v217, %v217
    %v226 = vcombine.high %v224, %v224
    %v227 = vcombine.high %v207, %v207
    %v229 = vunpack.c.l.s4 1983009808
    %v230 = vunpack.c.0.s8 %v229
    %v231 = vlaneseq
    %v232 = vshrl.u32 %v231, 7
    %v233 = vsub.s32 %v230, %v232
    %v234 = vrot.slane %v207, %v233
    %v236 = vunpack.c.l.s4 1983009808
    %v237 = vunpack.c.0.s8 %v236
    %v238 = vlaneseq
    %v239 = vshrl.u32 %v238, 7
    %v240 = vsub.s32 %v237, %v239
    %v241 = vrot.slane %v227, %v240
    %v242 = vcombine.high %v234, %v234
    %v243 = vcombine.high %v241, %v241
    %252 = vrot.lane.b32.xlu0 %v217, 127
    %v253 = vpop.permute.xlu0 %252
    %254 = vrot.lane.b32.xlu0 %v225, 127
    %v255 = vpop.permute.xlu0 %254
    %256 = vrot.lane.b32.xlu0 %v224, 127
    %v257 = vpop.permute.xlu0 %256
    %258 = vrot.lane.b32.xlu0 %v226, 127
    %v259 = vpop.permute.xlu0 %258
    %260 = vrot.lane.b32.xlu0 %v234, 127
    %v261 = vpop.permute.xlu0 %260
    %262 = vrot.lane.b32.xlu0 %v242, 127
    %v263 = vpop.permute.xlu0 %262
    %264 = vrot.lane.b32.xlu0 %v241, 127
    %v265 = vpop.permute.xlu0 %264
    %266 = vrot.lane.b32.xlu0 %v243, 127
    %v267 = vpop.permute.xlu0 %266
    %v268 = vlaneseq
    %v269 = vand.u32 %v268, 127
    %vm270 = vcmp.lt.s32.totalorder %v269, 127
    %v271 = vsel %vm270, %v265, %v267
    %v272 = vsel %vm270, %v263, %v265
    %v273 = vsel %vm270, %v261, %v263
    %v274 = vsel %vm270, %v259, %v261
    %v275 = vsel %vm270, %v257, %v259
    %v276 = vsel %vm270, %v255, %v257
    %v277 = vsel %vm270, %v253, %v255
    %v278 = vsel %vm270, %v267, %v253
    %279 = vrot.lane.b32.xlu0 %v217, 1
    %v280 = vpop.permute.xlu0 %279
    %281 = vrot.lane.b32.xlu0 %v225, 1
    %v282 = vpop.permute.xlu0 %281
    %283 = vrot.lane.b32.xlu0 %v224, 1
    %v284 = vpop.permute.xlu0 %283
    %285 = vrot.lane.b32.xlu0 %v226, 1
    %v286 = vpop.permute.xlu0 %285
    %287 = vrot.lane.b32.xlu0 %v234, 1
    %v288 = vpop.permute.xlu0 %287
    %289 = vrot.lane.b32.xlu0 %v242, 1
    %v290 = vpop.permute.xlu0 %289
    %291 = vrot.lane.b32.xlu0 %v241, 1
    %v292 = vpop.permute.xlu0 %291
    %293 = vrot.lane.b32.xlu0 %v243, 1
    %v294 = vpop.permute.xlu0 %293
    %vm295 = vcmp.lt.s32.totalorder %v269, 1
    %v296 = vsel %vm295, %v292, %v294
    %v297 = vsel %vm295, %v290, %v292
    %v298 = vsel %vm295, %v288, %v290
    %v299 = vsel %vm295, %v286, %v288
    %v300 = vsel %vm295, %v284, %v286
    %v301 = vsel %vm295, %v282, %v284
    %v302 = vsel %vm295, %v280, %v282
    %v303 = vsel %vm295, %v294, %v280
    %v304 = vadd.s32 %v269, 128
    %v305 = vadd.s32 %v269, 256
    %v306 = vadd.s32 %v269, 384
    %v307 = vadd.s32 %v269, 512
    %v308 = vadd.s32 %v269, 640
    %v309 = vadd.s32 %v269, 768
    %v310 = vadd.s32 %v269, 896
    %v311 = vand.u32 %v269, 1
    %v312 = vand.u32 %v304, 1
    %v313 = vand.u32 %v305, 1
    %v314 = vand.u32 %v306, 1
    %v315 = vand.u32 %v307, 1
    %v316 = vand.u32 %v308, 1
    %v317 = vand.u32 %v309, 1
    %v318 = vand.u32 %v310, 1
    %vm319 = vcmp.eq.s32.totalorder %v311, 0
    %vm320 = vcmp.eq.s32.totalorder %v312, 0
    %vm321 = vcmp.eq.s32.totalorder %v313, 0
    %vm322 = vcmp.eq.s32.totalorder %v314, 0
    %vm323 = vcmp.eq.s32.totalorder %v315, 0
    %vm324 = vcmp.eq.s32.totalorder %v316, 0
    %vm325 = vcmp.eq.s32.totalorder %v317, 0
    %vm326 = vcmp.eq.s32.totalorder %v318, 0
    %v327 = vsel %vm319, %v277, %v303
    %v328 = vsel %vm320, %v276, %v302
    %v329 = vsel %vm321, %v275, %v301
    %v330 = vsel %vm322, %v274, %v300
    %v331 = vsel %vm323, %v273, %v299
    %v332 = vsel %vm324, %v272, %v298
    %v333 = vsel %vm325, %v271, %v297
    %v334 = vsel %vm326, %v278, %v296
    %v335 = vld [vmem:[#allocation2] sm:$0xff]
    %v336 = vld [vmem:[#allocation2 + $0x8] sm:$0xff]
    %v337 = vmul.f32 %v335, %v206
    %v338 = vmul.f32 %v336, %v207
    %v339 = vld [vmem:[#allocation3] sm:$0xff]
    %v340 = vld [vmem:[#allocation3 + $0x8] sm:$0xff]
    %v349 = vcombine.low %v327, %v328
    %v350 = vcombine.low %v329, %v330
    %v352 = vunpack.c.l.s4 1983009808
    %v353 = vunpack.c.0.s8 %v352
    %v354 = vlaneseq
    %v355 = vshrl.u32 %v354, 7
    %v356 = vsub.s32 %v353, %v355
    %v357 = vrot.slane %v349, %v356
    %v359 = vunpack.c.l.s4 1983009808
    %v360 = vunpack.c.0.s8 %v359
    %v361 = vlaneseq
    %v362 = vshrl.u32 %v361, 7
    %v363 = vsub.s32 %v360, %v362
    %v364 = vrot.slane %v350, %v363
    %v365 = vcombine.low %v357, %v364
    %v366 = vcombine.low %v331, %v332
    %v367 = vcombine.low %v333, %v334
    %v369 = vunpack.c.l.s4 1983009808
    %v370 = vunpack.c.0.s8 %v369
    %v371 = vlaneseq
    %v372 = vshrl.u32 %v371, 7
    %v373 = vsub.s32 %v370, %v372
    %v374 = vrot.slane %v366, %v373
    %v376 = vunpack.c.l.s4 1983009808
    %v377 = vunpack.c.0.s8 %v376
    %v378 = vlaneseq
    %v379 = vshrl.u32 %v378, 7
    %v380 = vsub.s32 %v377, %v379
    %v381 = vrot.slane %v367, %v380
    %v382 = vcombine.low %v374, %v381
    %v385 = vmul.f32 %v339, %v365
    %v386 = vmul.f32 %v340, %v382
    %v387 = vadd.f32 %v337, %v385
    %v388 = vadd.f32 %v338, %v386
    %v389 = vld [vmem:[#allocation4] sm:$0xff]
    %v390 = vld [vmem:[#allocation4 + $0x8] sm:$0xff]
    %v391 = vadd.f32 %v387, %v389
    %v392 = vadd.f32 %v388, %v390
    %393 = vst [vmem:[#allocation10] sm:$0xff] %v391
    %394 = vst [vmem:[#allocation10 + $0x8] sm:$0xff] %v392
    // Predicated region
    $region22: #{tpu_custom_call.1} parent=1 // pred_check
      _
    $region23: #{tpu_custom_call.1} parent=1 // pred_check_branch
      %396 = sbr.rel (0) target = $region25
    $region24: #{tpu_custom_call.1} parent=1 // pred_region
      %s398 = ssub.s32 256, 256
      %399 = vsyncadd [#allocation7], %s398
      %s401 = sshll.u32 [#allocation10], 4
      %s402 = int_to_ptr.vmem [resolvable:$true] %s401
      %404 = dma.vmem_to_hbm [thread:$0]  %s402, 256, %s2, [#allocation7]
    $region25: #{tpu_custom_call.1} parent=1 // pred_fallthru
      _
    // Predicated region
    $region26: #{tpu_custom_call.1} parent=1 // pred_check
      _
    $region27: #{tpu_custom_call.1} parent=1 // pred_check_branch
      %406 = sbr.rel (0) target = $region29
    $region28: #{tpu_custom_call.1} parent=1 // pred_region
      %407 = dma.done [#allocation7], 256
    $region29: #{tpu_custom_call.1} parent=1 // pred_fallthru
      _
    %408 = vsyncpa [#allocation6], 1
    %409 = vsyncpa [#allocation9], 1
    %410 = vsyncpa [#allocation7], 1

</llo_original>
